<compile_context>
chip_gen: v7x
topology: tpu7x:2x2x1
jax: 0.10.0
libtpu: 0.0.40
codegen_flags: <defaults>
</compile_context>

<pallas_src>
import functools

import jax
import jax.numpy as jnp
from jax import lax
from jax.experimental import pallas as pl
from jax.experimental.pallas import tpu as pltpu


HIDDEN = 64          # logical hidden width of the Critic MLP
HIDDEN_PAD = 128     # padded to a full 128-lane vreg width (zero padding, exact)
TILE_B = 512         # batch rows per grid step (multiple of 128 -> lane-dense out)
MATMUL_DTYPE = jnp.bfloat16   # MXU input precision; accumulation stays f32


def critic_kernel(x_ref, w1_ref, b1_ref, w2_ref, b2_ref, w3_ref, b3_ref, o_ref):
    """Fused 3-layer MLP for one batch tile.

    x_ref : (TILE_B, obs_dim)   bf16  (one batch tile)
    w1_ref: (obs_dim, 128)      bf16  (out-cols zero-padded 64->128)
    b1_ref: (1, 128)            f32
    w2_ref: (128, 128)          bf16  (zero-padded)
    b2_ref: (1, 128)            f32
    w3_ref: (8, 128)            bf16  (row 0 = w3^T, rows 1..7 zero)
    b3_ref: (1, 1)              f32
    o_ref : (8, TILE_B)         f32   (row 0 = values; batch on the lane axis)
    """
    x = x_ref[...]

    # Layer 1: bf16 MXU matmul with f32 accumulation; bias + ReLU in f32 (VPU).
    h1 = jnp.dot(x, w1_ref[...], preferred_element_type=jnp.float32) + b1_ref[...]
    h1 = jnp.maximum(h1, 0.0)

    # Layer 2.
    h2 = jnp.dot(h1.astype(w2_ref.dtype), w2_ref[...],
                 preferred_element_type=jnp.float32) + b2_ref[...]
    h2 = jnp.maximum(h2, 0.0)

    # Layer 3: contract the hidden axis of both operands (w3_row @ h2^T) so the
    # batch lands on the lane axis -> dense 128-lane output stores.
    v = lax.dot_general(
        w3_ref[...], h2.astype(w3_ref.dtype),
        dimension_numbers=(((1,), (1,)), ((), ())),
        preferred_element_type=jnp.float32,
    )                                            # (8, TILE_B); row 0 is the value
    o_ref[...] = v + b3_ref[...]


def _prepare_params(params, matmul_dtype=MATMUL_DTYPE):
    """Pad hidden 64 -> 128 with exact zeros and cast weights for the MXU."""
    w1, b1, w2, b2, w3, b3 = params
    pad_h = HIDDEN_PAD - HIDDEN
    w1p = jnp.pad(w1, ((0, 0), (0, pad_h))).astype(matmul_dtype)        # (obs, 128)
    b1p = jnp.pad(b1, ((0, 0), (0, pad_h))).astype(jnp.float32)         # (1, 128)
    w2p = jnp.pad(w2, ((0, pad_h), (0, pad_h))).astype(matmul_dtype)    # (128, 128)
    b2p = jnp.pad(b2, ((0, 0), (0, pad_h))).astype(jnp.float32)         # (1, 128)
    w3p = jnp.pad(w3.T, ((0, 7), (0, pad_h))).astype(matmul_dtype)      # (8, 128)
    b3p = b3.astype(jnp.float32)                                        # (1, 1)
    return w1p, b1p, w2p, b2p, w3p, b3p


@functools.partial(jax.jit, static_argnames=("tile_b",))
def critic_forward(state, params, *, tile_b=TILE_B):
    """state: (B, obs_dim) float32 -> (B, 1) float32 (PyTorch Critic semantics)."""
    w1p, b1p, w2p, b2p, w3p, b3p = _prepare_params(params)
    B, obs_dim = state.shape

    # Pad the batch so every grid tile is full (padded rows are discarded).
    num_tiles = pl.cdiv(B, tile_b)
    B_pad = num_tiles * tile_b
    x = state.astype(w1p.dtype)
    if B_pad != B:
        x = jnp.pad(x, ((0, B_pad - B), (0, 0)))

    full = lambda a: pl.BlockSpec(a.shape, lambda i: (0,) * a.ndim)  # VMEM-resident

    out = pl.pallas_call(
        critic_kernel,
        out_shape=jax.ShapeDtypeStruct((8, B_pad), jnp.float32),
        grid=(num_tiles,),
        in_specs=[
            pl.BlockSpec((tile_b, obs_dim), lambda i: (i, 0)),   # batch tile
            full(w1p), full(b1p), full(w2p), full(b2p), full(w3p), full(b3p),
        ],
        out_specs=pl.BlockSpec((8, tile_b), lambda i: (0, i)),   # lane-dense tile
        compiler_params=pltpu.CompilerParams(
            dimension_semantics=("parallel",),   # megacore sharding on v7x
        ),
    )(x, w1p, b1p, w2p, b2p, w3p, b3p)

    # Row 0 holds the values (rows 1..7 come from the zero-padded w3 rows);
    # transpose the lane-dense (1, B) slab back to the PyTorch (B, 1) layout.
    return out[0, :B].reshape(B, 1)


def init_params(key, obs_dim, hidden=HIDDEN):
    """Deterministic synthetic init (uniform, Kaiming-ish scale like torch.nn.Linear)."""
    ks = jax.random.split(key, 6)

    def lin(kw, kb, fan_in, fan_out):
        bound = 1.0 / jnp.sqrt(fan_in)
        w = jax.random.uniform(kw, (fan_in, fan_out), jnp.float32, -bound, bound)
        b = jax.random.uniform(kb, (1, fan_out), jnp.float32, -bound, bound)
        return w, b

    w1, b1 = lin(ks[0], ks[1], obs_dim, hidden)
    w2, b2 = lin(ks[2], ks[3], hidden, hidden)
    w3, b3 = lin(ks[4], ks[5], hidden, 1)
    return (w1, b1, w2, b2, w3, b3)


if __name__ == "__main__":
    key = jax.random.PRNGKey(0)
    k_params, k_state = jax.random.split(key)

    batch = 2
    obs_dim = 8          # env.observation_space.shape[0] (synthetic)

    params = init_params(k_params, obs_dim, hidden=HIDDEN)
    state = jax.random.normal(k_state, (batch, obs_dim), jnp.float32)

    out = jax.block_until_ready(critic_forward(state, params))
    assert out.shape == (batch, 1)

    w1, b1, w2, b2, w3, b3 = params
    bf16 = jnp.bfloat16

    # Reference A: identical math to the kernel (bf16 MXU inputs, f32 accumulation).
    r = jnp.maximum(jnp.dot(state.astype(bf16), w1.astype(bf16),
                            preferred_element_type=jnp.float32) + b1, 0.0)
    r = jnp.maximum(jnp.dot(r.astype(bf16), w2.astype(bf16),
                            preferred_element_type=jnp.float32) + b2, 0.0)
    ref_bf16 = jnp.dot(r.astype(bf16), w3.astype(bf16),
                       preferred_element_type=jnp.float32) + b3
    err_a = float(jnp.max(jnp.abs(out - ref_bf16)))
    assert jnp.allclose(out, ref_bf16, atol=1e-3, rtol=1e-3), f"bf16-ref max err {err_a}"

    # Reference B: pure-f32 PyTorch module semantics (loose tol: bf16 MXU inputs).
    ref = jnp.maximum(state @ w1 + b1, 0.0)
    ref = jnp.maximum(ref @ w2 + b2, 0.0)
    ref = ref @ w3 + b3
    err_b = float(jnp.max(jnp.abs(out - ref)))
    assert jnp.allclose(out, ref, atol=5e-2, rtol=5e-2), f"f32-ref max err {err_b}"

    print("KERNEL_OK")
</pallas_src>

<mosaic_0001>
module attributes {stable_mosaic.version = 11 : i64} {
  func.func @critic_kernel(%arg0: i32, %arg1: memref<512x8xbf16, #tpu.memory_space<vmem>>, %arg2: memref<8x128xbf16, #tpu.memory_space<vmem>>, %arg3: memref<1x128xf32, #tpu.memory_space<vmem>>, %arg4: memref<128x128xbf16, #tpu.memory_space<vmem>>, %arg5: memref<1x128xf32, #tpu.memory_space<vmem>>, %arg6: memref<8x128xbf16, #tpu.memory_space<vmem>>, %arg7: memref<1x1xf32, #tpu.memory_space<vmem>>, %arg8: memref<8x512xf32, #tpu.memory_space<vmem>>) attributes {dimension_semantics = [#tpu.dimension_semantics<parallel>], iteration_bounds = array<i64: 1>, scalar_prefetch = 0 : i64, scratch_operands = 0 : i64, tpu.core_type = #tpu.core_type<tc>, window_params = [{transform_indices = @transform_0, window_bounds = array<i64: 512, 8>}, {pipeline_mode = #tpu.pipeline_mode<synchronous>, transform_indices = @transform_1, window_bounds = array<i64: 8, 128>}, {pipeline_mode = #tpu.pipeline_mode<synchronous>, transform_indices = @transform_2, window_bounds = array<i64: 1, 128>}, {pipeline_mode = #tpu.pipeline_mode<synchronous>, transform_indices = @transform_3, window_bounds = array<i64: 128, 128>}, {pipeline_mode = #tpu.pipeline_mode<synchronous>, transform_indices = @transform_4, window_bounds = array<i64: 1, 128>}, {pipeline_mode = #tpu.pipeline_mode<synchronous>, transform_indices = @transform_5, window_bounds = array<i64: 8, 128>}, {pipeline_mode = #tpu.pipeline_mode<synchronous>, transform_indices = @transform_6, window_bounds = array<i64: 1, 1>}, {transform_indices = @transform_7, window_bounds = array<i64: 8, 512>}]} {
    %c0 = arith.constant 0 : index
    %c0_0 = arith.constant 0 : index
    %0 = vector.load %arg1[%c0, %c0_0] : memref<512x8xbf16, #tpu.memory_space<vmem>>, vector<512x8xbf16>
    %c0_1 = arith.constant 0 : index
    %c0_2 = arith.constant 0 : index
    %1 = vector.load %arg2[%c0_1, %c0_2] : memref<8x128xbf16, #tpu.memory_space<vmem>>, vector<8x128xbf16>
    %cst = arith.constant dense<0.000000e+00> : vector<512x128xf32>
    %2 = tpu.matmul %0, %1, %cst {dimension_numbers = #tpu.dot_dimension_numbers<[1], [0], [0], [1], [0, 0, 1, 1], [], []>} : vector<512x8xbf16>, vector<8x128xbf16>, vector<512x128xf32> -> vector<512x128xf32>
    %c0_3 = arith.constant 0 : index
    %c0_4 = arith.constant 0 : index
    %3 = vector.load %arg3[%c0_3, %c0_4] : memref<1x128xf32, #tpu.memory_space<vmem>>, vector<1x128xf32>
    %4 = vector.broadcast %3 : vector<1x128xf32> to vector<512x128xf32>
    %5 = arith.addf %2, %4 : vector<512x128xf32>
    %cst_5 = arith.constant 0.000000e+00 : f32
    %6 = vector.broadcast %cst_5 : f32 to vector<512x128xf32>
    %7 = arith.maximumf %5, %6 : vector<512x128xf32>
    %8 = arith.truncf %7 : vector<512x128xf32> to vector<512x128xbf16>
    %c0_6 = arith.constant 0 : index
    %c0_7 = arith.constant 0 : index
    %9 = vector.load %arg4[%c0_6, %c0_7] : memref<128x128xbf16, #tpu.memory_space<vmem>>, vector<128x128xbf16>
    %cst_8 = arith.constant dense<0.000000e+00> : vector<512x128xf32>
    %10 = tpu.matmul %8, %9, %cst_8 {dimension_numbers = #tpu.dot_dimension_numbers<[1], [0], [0], [1], [0, 0, 1, 1], [], []>} : vector<512x128xbf16>, vector<128x128xbf16>, vector<512x128xf32> -> vector<512x128xf32>
    %c0_9 = arith.constant 0 : index
    %c0_10 = arith.constant 0 : index
    %11 = vector.load %arg5[%c0_9, %c0_10] : memref<1x128xf32, #tpu.memory_space<vmem>>, vector<1x128xf32>
    %12 = vector.broadcast %11 : vector<1x128xf32> to vector<512x128xf32>
    %13 = arith.addf %10, %12 : vector<512x128xf32>
    %cst_11 = arith.constant 0.000000e+00 : f32
    %14 = vector.broadcast %cst_11 : f32 to vector<512x128xf32>
    %15 = arith.maximumf %13, %14 : vector<512x128xf32>
    %c0_12 = arith.constant 0 : index
    %c0_13 = arith.constant 0 : index
    %16 = vector.load %arg6[%c0_12, %c0_13] : memref<8x128xbf16, #tpu.memory_space<vmem>>, vector<8x128xbf16>
    %17 = arith.truncf %15 : vector<512x128xf32> to vector<512x128xbf16>
    %cst_14 = arith.constant dense<0.000000e+00> : vector<8x512xf32>
    %18 = tpu.matmul %16, %17, %cst_14 {dimension_numbers = #tpu.dot_dimension_numbers<[1], [1], [0], [0], [0, 0, 1, 0], [], []>} : vector<8x128xbf16>, vector<512x128xbf16>, vector<8x512xf32> -> vector<8x512xf32>
    %c0_15 = arith.constant 0 : index
    %c0_16 = arith.constant 0 : index
    %19 = vector.load %arg7[%c0_15, %c0_16] : memref<1x1xf32, #tpu.memory_space<vmem>>, vector<1x1xf32>
    %20 = vector.broadcast %19 : vector<1x1xf32> to vector<8x512xf32>
    %21 = arith.addf %18, %20 : vector<8x512xf32>
    %c0_17 = arith.constant 0 : index
    %c0_18 = arith.constant 0 : index
    %22 = vector.load %arg8[%c0_17, %c0_18] : memref<8x512xf32, #tpu.memory_space<vmem>>, vector<8x512xf32>
    tpu.vector_store %arg8[%c0_17, %c0_18], %21 {strides = array<i32>} : memref<8x512xf32, #tpu.memory_space<vmem>>, vector<8x512xf32>,
    return
  }
  func.func @transform_0(%arg0: i32) -> (i32, i32) {
    %c0_i32 = arith.constant 0 : i32
    %c0_i32_0 = arith.constant 0 : i32
    return %arg0, %c0_i32 : i32, i32
  }
  func.func @transform_1(%arg0: i32) -> (i32, i32) {
    %c0_i32 = arith.constant 0 : i32
    %c0_i32_0 = arith.constant 0 : i32
    %c0_i32_1 = arith.constant 0 : i32
    return %c0_i32, %c0_i32_0 : i32, i32
  }
  func.func @transform_2(%arg0: i32) -> (i32, i32) {
    %c0_i32 = arith.constant 0 : i32
    %c0_i32_0 = arith.constant 0 : i32
    %c0_i32_1 = arith.constant 0 : i32
    return %c0_i32, %c0_i32_0 : i32, i32
  }
  func.func @transform_3(%arg0: i32) -> (i32, i32) {
    %c0_i32 = arith.constant 0 : i32
    %c0_i32_0 = arith.constant 0 : i32
    %c0_i32_1 = arith.constant 0 : i32
    return %c0_i32, %c0_i32_0 : i32, i32
  }
  func.func @transform_4(%arg0: i32) -> (i32, i32) {
    %c0_i32 = arith.constant 0 : i32
    %c0_i32_0 = arith.constant 0 : i32
    %c0_i32_1 = arith.constant 0 : i32
    return %c0_i32, %c0_i32_0 : i32, i32
  }
  func.func @transform_5(%arg0: i32) -> (i32, i32) {
    %c0_i32 = arith.constant 0 : i32
    %c0_i32_0 = arith.constant 0 : i32
    %c0_i32_1 = arith.constant 0 : i32
    return %c0_i32, %c0_i32_0 : i32, i32
  }
  func.func @transform_6(%arg0: i32) -> (i32, i32) {
    %c0_i32 = arith.constant 0 : i32
    %c0_i32_0 = arith.constant 0 : i32
    %c0_i32_1 = arith.constant 0 : i32
    return %c0_i32, %c0_i32_0 : i32, i32
  }
  func.func @transform_7(%arg0: i32) -> (i32, i32) {
    %c0_i32 = arith.constant 0 : i32
    %c0_i32_0 = arith.constant 0 : i32
    return %c0_i32, %arg0 : i32, i32
  }
}

</mosaic_0001>

<llo_original>
// kernel: critic_forward.1
$region0: #{critic_forward.1}
  #allocation0 [shape = 'u32[]', space=smem, size = 0x4, offset = 0x4, fixed_abs, tag = 'smem constant byte address 0x4 - core index']
  #allocation1 [shape = 'u32[144,128]{1,0:T(1,128)}', space=vmem, size = 0x12000, scoped, tag = 'internal scratch']
  #allocation2 [shape = 'f32[1,1]{1,0:T(1,128)S(1)}', space=vmem, size = 0x200, scoped, tag = 'scoped memory for critic_forward.1']
  %s0 = inlined_call_operand.vmem [shape: bf16[512,8], index: 0, kind: input, shape index: {}]
  %s1 = inlined_call_operand.vmem [shape: bf16[8,128], index: 1, kind: input, shape index: {}]
  %s2 = inlined_call_operand.vmem [shape: f32[1,128], index: 2, kind: input, shape index: {}]
  %s3 = inlined_call_operand.vmem [shape: bf16[128,128], index: 3, kind: input, shape index: {}]
  %s4 = inlined_call_operand.vmem [shape: f32[1,128], index: 4, kind: input, shape index: {}]
  %s5 = inlined_call_operand.vmem [shape: bf16[8,128], index: 5, kind: input, shape index: {}]
  %s6 = inlined_call_operand.<no memory space> [shape: f32[1,1], index: 6, kind: input, shape index: {}]
  %s7 = inlined_call_operand.vmem [shape: f32[8,512], index: 7, kind: output, shape index: {}]
  %s8 = sld [smem:[#allocation0]]
  $region38: #{critic_forward.1} parent=0
    _
  %s10 = ssub.s32 1, %s8
  %s11 = scalar_select 0, %s10, %s8
  %v12 = vstv %s6
  %13 = vst [vmem:[#allocation2] sm:$0x1] %v12
  // Predicated region
  $region2: #{critic_forward.1} parent=0 // pred_check
    _
  $region3: #{critic_forward.1} parent=0 // pred_check_branch
    %15 = sbr.rel (0) target = $region5
  $region4: #{critic_forward.1} parent=0 // pred_region
    _
  $region5: #{critic_forward.1} parent=0 // pred_fallthru
    _
  // Predicated region
  $region6: #{critic_forward.1} parent=0 // pred_check
    _
  $region7: #{critic_forward.1} parent=0 // pred_check_branch
    %17 = sbr.rel (0) target = $region9
  $region8: #{critic_forward.1} parent=0 // pred_region
    _
  $region9: #{critic_forward.1} parent=0 // pred_fallthru
    _
  // Predicated region
  $region10: #{critic_forward.1} parent=0 // pred_check
    _
  $region11: #{critic_forward.1} parent=0 // pred_check_branch
    %19 = sbr.rel (0) target = $region13
  $region12: #{critic_forward.1} parent=0 // pred_region
    _
  $region13: #{critic_forward.1} parent=0 // pred_fallthru
    _
  // Predicated region
  $region14: #{critic_forward.1} parent=0 // pred_check
    _
  $region15: #{critic_forward.1} parent=0 // pred_check_branch
    %21 = sbr.rel (0) target = $region17
  $region16: #{critic_forward.1} parent=0 // pred_region
    _
  $region17: #{critic_forward.1} parent=0 // pred_fallthru
    _
  // Predicated region
  $region18: #{critic_forward.1} parent=0 // pred_check
    _
  $region19: #{critic_forward.1} parent=0 // pred_check_branch
    %23 = sbr.rel (0) target = $region21
  $region20: #{critic_forward.1} parent=0 // pred_region
    _
  $region21: #{critic_forward.1} parent=0 // pred_fallthru
    _
  // Predicated region
  $region22: #{critic_forward.1} parent=0 // pred_check
    _
  $region23: #{critic_forward.1} parent=0 // pred_check_branch
    %25 = sbr.rel (0) target = $region25
  $region24: #{critic_forward.1} parent=0 // pred_region
    _
  $region25: #{critic_forward.1} parent=0 // pred_fallthru
    _
  // Predicated region
  $region26: #{critic_forward.1} parent=0 // pred_check
    _
  $region27: #{critic_forward.1} parent=0 // pred_check_branch
    %27 = sbr.rel (0) target = $region29
  $region28: #{critic_forward.1} parent=0 // pred_region
    _
  $region29: #{critic_forward.1} parent=0 // pred_fallthru
    _
  %v29 = vld [vmem:[%s0] sm:$0xf]
  %v30 = vld [vmem:[%s0 + $0x4] sm:$0xf]
  %v31 = vld [vmem:[%s0 + $0x8] sm:$0xf]
  %v32 = vld [vmem:[%s0 + $0xc] sm:$0xf]
  %v33 = vld [vmem:[%s0 + $0x10] sm:$0xf]
  %v34 = vld [vmem:[%s0 + $0x14] sm:$0xf]
  %v35 = vld [vmem:[%s0 + $0x18] sm:$0xf]
  %v36 = vld [vmem:[%s0 + $0x1c] sm:$0xf]
  %v37 = vld [vmem:[%s0 + $0x20] sm:$0xf]
  %v38 = vld [vmem:[%s0 + $0x24] sm:$0xf]
  %v39 = vld [vmem:[%s0 + $0x28] sm:$0xf]
  %v40 = vld [vmem:[%s0 + $0x2c] sm:$0xf]
  %v41 = vld [vmem:[%s0 + $0x30] sm:$0xf]
  %v42 = vld [vmem:[%s0 + $0x34] sm:$0xf]
  %v43 = vld [vmem:[%s0 + $0x38] sm:$0xf]
  %v44 = vld [vmem:[%s0 + $0x3c] sm:$0xf]
  %v45 = vld [vmem:[%s0 + $0x40] sm:$0xf]
  %v46 = vld [vmem:[%s0 + $0x44] sm:$0xf]
  %v47 = vld [vmem:[%s0 + $0x48] sm:$0xf]
  %v48 = vld [vmem:[%s0 + $0x4c] sm:$0xf]
  %v49 = vld [vmem:[%s0 + $0x50] sm:$0xf]
  %v50 = vld [vmem:[%s0 + $0x54] sm:$0xf]
  %v51 = vld [vmem:[%s0 + $0x58] sm:$0xf]
  %v52 = vld [vmem:[%s0 + $0x5c] sm:$0xf]
  %v53 = vld [vmem:[%s0 + $0x60] sm:$0xf]
  %v54 = vld [vmem:[%s0 + $0x64] sm:$0xf]
  %v55 = vld [vmem:[%s0 + $0x68] sm:$0xf]
  %v56 = vld [vmem:[%s0 + $0x6c] sm:$0xf]
  %v57 = vld [vmem:[%s0 + $0x70] sm:$0xf]
  %v58 = vld [vmem:[%s0 + $0x74] sm:$0xf]
  %v59 = vld [vmem:[%s0 + $0x78] sm:$0xf]
  %v60 = vld [vmem:[%s0 + $0x7c] sm:$0xf]
  %v61 = vld [vmem:[%s0 + $0x80] sm:$0xf]
  %v62 = vld [vmem:[%s0 + $0x84] sm:$0xf]
  %v63 = vld [vmem:[%s0 + $0x88] sm:$0xf]
  %v64 = vld [vmem:[%s0 + $0x8c] sm:$0xf]
  %v65 = vld [vmem:[%s0 + $0x90] sm:$0xf]
  %v66 = vld [vmem:[%s0 + $0x94] sm:$0xf]
  %v67 = vld [vmem:[%s0 + $0x98] sm:$0xf]
  %v68 = vld [vmem:[%s0 + $0x9c] sm:$0xf]
  %v69 = vld [vmem:[%s0 + $0xa0] sm:$0xf]
  %v70 = vld [vmem:[%s0 + $0xa4] sm:$0xf]
  %v71 = vld [vmem:[%s0 + $0xa8] sm:$0xf]
  %v72 = vld [vmem:[%s0 + $0xac] sm:$0xf]
  %v73 = vld [vmem:[%s0 + $0xb0] sm:$0xf]
  %v74 = vld [vmem:[%s0 + $0xb4] sm:$0xf]
  %v75 = vld [vmem:[%s0 + $0xb8] sm:$0xf]
  %v76 = vld [vmem:[%s0 + $0xbc] sm:$0xf]
  %v77 = vld [vmem:[%s0 + $0xc0] sm:$0xf]
  %v78 = vld [vmem:[%s0 + $0xc4] sm:$0xf]
  %v79 = vld [vmem:[%s0 + $0xc8] sm:$0xf]
  %v80 = vld [vmem:[%s0 + $0xcc] sm:$0xf]
  %v81 = vld [vmem:[%s0 + $0xd0] sm:$0xf]
  %v82 = vld [vmem:[%s0 + $0xd4] sm:$0xf]
  %v83 = vld [vmem:[%s0 + $0xd8] sm:$0xf]
  %v84 = vld [vmem:[%s0 + $0xdc] sm:$0xf]
  %v85 = vld [vmem:[%s0 + $0xe0] sm:$0xf]
  %v86 = vld [vmem:[%s0 + $0xe4] sm:$0xf]
  %v87 = vld [vmem:[%s0 + $0xe8] sm:$0xf]
  %v88 = vld [vmem:[%s0 + $0xec] sm:$0xf]
  %v89 = vld [vmem:[%s0 + $0xf0] sm:$0xf]
  %v90 = vld [vmem:[%s0 + $0xf4] sm:$0xf]
  %v91 = vld [vmem:[%s0 + $0xf8] sm:$0xf]
  %v92 = vld [vmem:[%s0 + $0xfc] sm:$0xf]
  %v93 = vld [vmem:[%s1] sm:$0xf]
  %v94 = vld [vmem:[%s2] sm:$0x1]
  %v96 = vlaneseq
  %v97 = vshrl.u32 %v96, 7
  %v98 = vsub.s32 0, %v97
  %v99 = vrot.slane %v94, %v98
  %v165 = vunpack.c.l.b16 %v29
  %v166 = vunpack.c.l.b16 %v30
  %v167 = vunpack.c.l.b16 %v31
  %v168 = vunpack.c.l.b16 %v32
  %v169 = vunpack.c.l.b16 %v33
  %v170 = vunpack.c.l.b16 %v34
  %v171 = vunpack.c.l.b16 %v35
  %v172 = vunpack.c.l.b16 %v36
  %v173 = vunpack.c.l.b16 %v37
  %v174 = vunpack.c.l.b16 %v38
  %v175 = vunpack.c.l.b16 %v39
  %v176 = vunpack.c.l.b16 %v40
  %v177 = vunpack.c.l.b16 %v41
  %v178 = vunpack.c.l.b16 %v42
  %v179 = vunpack.c.l.b16 %v43
  %v180 = vunpack.c.l.b16 %v44
  %v181 = vunpack.c.l.b16 %v45
  %v182 = vunpack.c.l.b16 %v46
  %v183 = vunpack.c.l.b16 %v47
  %v184 = vunpack.c.l.b16 %v48
  %v185 = vunpack.c.l.b16 %v49
  %v186 = vunpack.c.l.b16 %v50
  %v187 = vunpack.c.l.b16 %v51
  %v188 = vunpack.c.l.b16 %v52
  %v189 = vunpack.c.l.b16 %v53
  %v190 = vunpack.c.l.b16 %v54
  %v191 = vunpack.c.l.b16 %v55
  %v192 = vunpack.c.l.b16 %v56
  %v193 = vunpack.c.l.b16 %v57
  %v194 = vunpack.c.l.b16 %v58
  %v195 = vunpack.c.l.b16 %v59
  %v196 = vunpack.c.l.b16 %v60
  %v197 = vunpack.c.l.b16 %v61
  %v198 = vunpack.c.l.b16 %v62
  %v199 = vunpack.c.l.b16 %v63
  %v200 = vunpack.c.l.b16 %v64
  %v201 = vunpack.c.l.b16 %v65
  %v202 = vunpack.c.l.b16 %v66
  %v203 = vunpack.c.l.b16 %v67
  %v204 = vunpack.c.l.b16 %v68
  %v205 = vunpack.c.l.b16 %v69
  %v206 = vunpack.c.l.b16 %v70
  %v207 = vunpack.c.l.b16 %v71
  %v208 = vunpack.c.l.b16 %v72
  %v209 = vunpack.c.l.b16 %v73
  %v210 = vunpack.c.l.b16 %v74
  %v211 = vunpack.c.l.b16 %v75
  %v212 = vunpack.c.l.b16 %v76
  %v213 = vunpack.c.l.b16 %v77
  %v214 = vunpack.c.l.b16 %v78
  %v215 = vunpack.c.l.b16 %v79
  %v216 = vunpack.c.l.b16 %v80
  %v217 = vunpack.c.l.b16 %v81
  %v218 = vunpack.c.l.b16 %v82
  %v219 = vunpack.c.l.b16 %v83
  %v220 = vunpack.c.l.b16 %v84
  %v221 = vunpack.c.l.b16 %v85
  %v222 = vunpack.c.l.b16 %v86
  %v223 = vunpack.c.l.b16 %v87
  %v224 = vunpack.c.l.b16 %v88
  %v225 = vunpack.c.l.b16 %v89
  %v226 = vunpack.c.l.b16 %v90
  %v227 = vunpack.c.l.b16 %v91
  %v228 = vunpack.c.l.b16 %v92
  %v229 = vpack.c.b16 %v166, %v165
  %v230 = vpack.c.b16 %v168, %v167
  %v231 = vpack.c.b16 %v170, %v169
  %v232 = vpack.c.b16 %v172, %v171
  %v233 = vpack.c.b16 %v174, %v173
  %v234 = vpack.c.b16 %v176, %v175
  %v235 = vpack.c.b16 %v178, %v177
  %v236 = vpack.c.b16 %v180, %v179
  %v237 = vpack.c.b16 %v182, %v181
  %v238 = vpack.c.b16 %v184, %v183
  %v239 = vpack.c.b16 %v186, %v185
  %v240 = vpack.c.b16 %v188, %v187
  %v241 = vpack.c.b16 %v190, %v189
  %v242 = vpack.c.b16 %v192, %v191
  %v243 = vpack.c.b16 %v194, %v193
  %v244 = vpack.c.b16 %v196, %v195
  %v245 = vpack.c.b16 %v198, %v197
  %v246 = vpack.c.b16 %v200, %v199
  %v247 = vpack.c.b16 %v202, %v201
  %v248 = vpack.c.b16 %v204, %v203
  %v249 = vpack.c.b16 %v206, %v205
  %v250 = vpack.c.b16 %v208, %v207
  %v251 = vpack.c.b16 %v210, %v209
  %v252 = vpack.c.b16 %v212, %v211
  %v253 = vpack.c.b16 %v214, %v213
  %v254 = vpack.c.b16 %v216, %v215
  %v255 = vpack.c.b16 %v218, %v217
  %v256 = vpack.c.b16 %v220, %v219
  %v257 = vpack.c.b16 %v222, %v221
  %v258 = vpack.c.b16 %v224, %v223
  %v259 = vpack.c.b16 %v226, %v225
  %v260 = vpack.c.b16 %v228, %v227
  %vm261 = vcmask 64512
  %v263 = vsel %vm261, %v229, 0
  %v266 = vsel %vm261, %v230, 0
  %v269 = vsel %vm261, %v231, 0
  %v272 = vsel %vm261, %v232, 0
  %v275 = vsel %vm261, %v233, 0
  %v278 = vsel %vm261, %v234, 0
  %v281 = vsel %vm261, %v235, 0
  %v284 = vsel %vm261, %v236, 0
  %v287 = vsel %vm261, %v237, 0
  %v290 = vsel %vm261, %v238, 0
  %v293 = vsel %vm261, %v239, 0
  %v296 = vsel %vm261, %v240, 0
  %v299 = vsel %vm261, %v241, 0
  %v302 = vsel %vm261, %v242, 0
  %v305 = vsel %vm261, %v243, 0
  %v308 = vsel %vm261, %v244, 0
  %v311 = vsel %vm261, %v245, 0
  %v314 = vsel %vm261, %v246, 0
  %v317 = vsel %vm261, %v247, 0
  %v320 = vsel %vm261, %v248, 0
  %v323 = vsel %vm261, %v249, 0
  %v326 = vsel %vm261, %v250, 0
  %v329 = vsel %vm261, %v251, 0
  %v332 = vsel %vm261, %v252, 0
  %v335 = vsel %vm261, %v253, 0
  %v338 = vsel %vm261, %v254, 0
  %v341 = vsel %vm261, %v255, 0
  %v344 = vsel %vm261, %v256, 0
  %v347 = vsel %vm261, %v257, 0
  %v350 = vsel %vm261, %v258, 0
  %v353 = vsel %vm261, %v259, 0
  %v356 = vsel %vm261, %v260, 0
  %vm358 = vcmask 1043456
  %v360 = vsel %vm358, %v93, 0
  %362 = vmatprep.subr.bf16.mxu0 0
  %363 = vmatpush1.bf16.msra.mxu0 %v360
  %364 = vmatprep.subr.bf16.mxu0 0
  %365 = vmatpush1.bf16.msra.mxu0 0
  %366 = vmatprep.subr.bf16.mxu0 0
  %367 = vmatpush1.bf16.msra.mxu0 0
  %368 = vmatprep.subr.bf16.mxu0 0
  %369 = vmatpush1.bf16.msra.mxu0 0
  %370 = vmatprep.subr.bf16.mxu0 0
  %371 = vmatpush1.bf16.msra.mxu0 0
  %372 = vmatprep.subr.bf16.mxu0 0
  %373 = vmatpush1.bf16.msra.mxu0 0
  %374 = vmatprep.subr.bf16.mxu0 0
  %375 = vmatpush1.bf16.msra.mxu0 0
  %376 = vmatprep.subr.bf16.mxu0 0
  %377 = vmatpush1.bf16.msra.mxu0 0
  %378 = vmatprep.subr.bf16.mxu0 0
  %379 = vmatpush1.bf16.msra.mxu0 0
  %380 = vmatprep.subr.bf16.mxu0 0
  %381 = vmatpush1.bf16.msra.mxu0 0
  %382 = vmatprep.subr.bf16.mxu0 0
  %383 = vmatpush1.bf16.msra.mxu0 0
  %384 = vmatprep.subr.bf16.mxu0 0
  %385 = vmatpush1.bf16.msra.mxu0 0
  %386 = vmatprep.subr.bf16.mxu0 0
  %387 = vmatpush1.bf16.msra.mxu0 0
  %388 = vmatprep.subr.bf16.mxu0 0
  %389 = vmatpush1.bf16.msra.mxu0 0
  %390 = vmatprep.subr.bf16.mxu0 0
  %391 = vmatpush1.bf16.msra.mxu0 0
  %392 = vmatprep.subr.bf16.mxu0 0
  %393 = vmatpush1.bf16.msra.mxu0 0
  %394 = vmatprep.mubr.bf16.mxu0 0
  %395 = vmatmul.mubr.bf16.gmra.mrb[0].mxu0 %v263
  %v396 = vpop.f32.mrb[0].mxu0
  %v397 = vadd.f32 %v99, %v396
  %v398 = vpop.f32.mrb[0].mxu0
  %v399 = vpop.f32.mrb[0].mxu0
  %v400 = vadd.f32 %v99, %v399
  %v401 = vpop.f32.mrb[0].mxu0
  %402 = vmatprep.mubr.bf16.mxu0 0
  %403 = vmatmul.mubr.bf16.gmra.mrb[0].mxu0 %v266
  %v404 = vpop.f32.mrb[0].mxu0
  %v405 = vadd.f32 %v99, %v404
  %v406 = vpop.f32.mrb[0].mxu0
  %v407 = vpop.f32.mrb[0].mxu0
  %v408 = vadd.f32 %v99, %v407
  %v409 = vpop.f32.mrb[0].mxu0
  %410 = vmatprep.mubr.bf16.mxu0 0
  %411 = vmatmul.mubr.bf16.gmra.mrb[0].mxu0 %v269
  %v412 = vpop.f32.mrb[0].mxu0
  %v413 = vadd.f32 %v99, %v412
  %v414 = vpop.f32.mrb[0].mxu0
  %v415 = vpop.f32.mrb[0].mxu0
  %v416 = vadd.f32 %v99, %v415
  %v417 = vpop.f32.mrb[0].mxu0
  %418 = vmatprep.mubr.bf16.mxu0 0
  %419 = vmatmul.mubr.bf16.gmra.mrb[0].mxu0 %v272
  %v420 = vpop.f32.mrb[0].mxu0
  %v421 = vadd.f32 %v99, %v420
  %v422 = vpop.f32.mrb[0].mxu0
  %v423 = vpop.f32.mrb[0].mxu0
  %v424 = vadd.f32 %v99, %v423
  %v425 = vpop.f32.mrb[0].mxu0
  %426 = vmatprep.mubr.bf16.mxu0 0
  %427 = vmatmul.mubr.bf16.gmra.mrb[0].mxu0 %v275
  %v428 = vpop.f32.mrb[0].mxu0
  %v429 = vadd.f32 %v99, %v428
  %v430 = vpop.f32.mrb[0].mxu0
  %v431 = vpop.f32.mrb[0].mxu0
  %v432 = vadd.f32 %v99, %v431
  %v433 = vpop.f32.mrb[0].mxu0
  %434 = vmatprep.mubr.bf16.mxu0 0
  %435 = vmatmul.mubr.bf16.gmra.mrb[0].mxu0 %v278
  %v436 = vpop.f32.mrb[0].mxu0
  %v437 = vadd.f32 %v99, %v436
  %v438 = vpop.f32.mrb[0].mxu0
  %v439 = vpop.f32.mrb[0].mxu0
  %v440 = vadd.f32 %v99, %v439
  %v441 = vpop.f32.mrb[0].mxu0
  %442 = vmatprep.mubr.bf16.mxu0 0
  %443 = vmatmul.mubr.bf16.gmra.mrb[0].mxu0 %v281
  %v444 = vpop.f32.mrb[0].mxu0
  %v445 = vadd.f32 %v99, %v444
  %v446 = vpop.f32.mrb[0].mxu0
  %v447 = vpop.f32.mrb[0].mxu0
  %v448 = vadd.f32 %v99, %v447
  %v449 = vpop.f32.mrb[0].mxu0
  %450 = vmatprep.mubr.bf16.mxu0 0
  %451 = vmatmul.mubr.bf16.gmra.mrb[0].mxu0 %v284
  %v452 = vpop.f32.mrb[0].mxu0
  %v453 = vadd.f32 %v99, %v452
  %v454 = vpop.f32.mrb[0].mxu0
  %v455 = vpop.f32.mrb[0].mxu0
  %v456 = vadd.f32 %v99, %v455
  %v457 = vpop.f32.mrb[0].mxu0
  %458 = vmatprep.mubr.bf16.mxu0 0
  %459 = vmatmul.mubr.bf16.gmra.mrb[0].mxu0 %v287
  %v460 = vpop.f32.mrb[0].mxu0
  %v461 = vadd.f32 %v99, %v460
  %v462 = vpop.f32.mrb[0].mxu0
  %v463 = vpop.f32.mrb[0].mxu0
  %v464 = vadd.f32 %v99, %v463
  %v465 = vpop.f32.mrb[0].mxu0
  %466 = vmatprep.mubr.bf16.mxu0 0
  %467 = vmatmul.mubr.bf16.gmra.mrb[0].mxu0 %v290
  %v468 = vpop.f32.mrb[0].mxu0
  %v469 = vadd.f32 %v99, %v468
  %v470 = vpop.f32.mrb[0].mxu0
  %v471 = vpop.f32.mrb[0].mxu0
  %v472 = vadd.f32 %v99, %v471
  %v473 = vpop.f32.mrb[0].mxu0
  %474 = vmatprep.mubr.bf16.mxu0 0
  %475 = vmatmul.mubr.bf16.gmra.mrb[0].mxu0 %v293
  %v476 = vpop.f32.mrb[0].mxu0
  %v477 = vadd.f32 %v99, %v476
  %v478 = vpop.f32.mrb[0].mxu0
  %v479 = vpop.f32.mrb[0].mxu0
  %v480 = vadd.f32 %v99, %v479
  %v481 = vpop.f32.mrb[0].mxu0
  %482 = vmatprep.mubr.bf16.mxu0 0
  %483 = vmatmul.mubr.bf16.gmra.mrb[0].mxu0 %v296
  %v484 = vpop.f32.mrb[0].mxu0
  %v485 = vadd.f32 %v99, %v484
  %v486 = vpop.f32.mrb[0].mxu0
  %v487 = vpop.f32.mrb[0].mxu0
  %v488 = vadd.f32 %v99, %v487
  %v489 = vpop.f32.mrb[0].mxu0
  %490 = vmatprep.mubr.bf16.mxu0 0
  %491 = vmatmul.mubr.bf16.gmra.mrb[0].mxu0 %v299
  %v492 = vpop.f32.mrb[0].mxu0
  %v493 = vadd.f32 %v99, %v492
  %v494 = vpop.f32.mrb[0].mxu0
  %v495 = vpop.f32.mrb[0].mxu0
  %v496 = vadd.f32 %v99, %v495
  %v497 = vpop.f32.mrb[0].mxu0
  %498 = vmatprep.mubr.bf16.mxu0 0
  %499 = vmatmul.mubr.bf16.gmra.mrb[0].mxu0 %v302
  %v500 = vpop.f32.mrb[0].mxu0
  %v501 = vadd.f32 %v99, %v500
  %v502 = vpop.f32.mrb[0].mxu0
  %v503 = vpop.f32.mrb[0].mxu0
  %v504 = vadd.f32 %v99, %v503
  %v505 = vpop.f32.mrb[0].mxu0
  %506 = vmatprep.mubr.bf16.mxu0 0
  %507 = vmatmul.mubr.bf16.gmra.mrb[0].mxu0 %v305
  %v508 = vpop.f32.mrb[0].mxu0
  %v509 = vadd.f32 %v99, %v508
  %v510 = vpop.f32.mrb[0].mxu0
  %v511 = vpop.f32.mrb[0].mxu0
  %v512 = vadd.f32 %v99, %v511
  %v513 = vpop.f32.mrb[0].mxu0
  %514 = vmatprep.mubr.bf16.mxu0 0
  %515 = vmatmul.mubr.bf16.gmra.mrb[0].mxu0 %v308
  %v516 = vpop.f32.mrb[0].mxu0
  %v517 = vadd.f32 %v99, %v516
  %v518 = vpop.f32.mrb[0].mxu0
  %v519 = vpop.f32.mrb[0].mxu0
  %v520 = vadd.f32 %v99, %v519
  %v521 = vpop.f32.mrb[0].mxu0
  %522 = vmatprep.mubr.bf16.mxu0 0
  %523 = vmatmul.mubr.bf16.gmra.mrb[0].mxu0 %v311
  %v524 = vpop.f32.mrb[0].mxu0
  %v525 = vadd.f32 %v99, %v524
  %v526 = vpop.f32.mrb[0].mxu0
  %v527 = vpop.f32.mrb[0].mxu0
  %v528 = vadd.f32 %v99, %v527
  %v529 = vpop.f32.mrb[0].mxu0
  %530 = vmatprep.mubr.bf16.mxu0 0
  %531 = vmatmul.mubr.bf16.gmra.mrb[0].mxu0 %v314
  %v532 = vpop.f32.mrb[0].mxu0
  %v533 = vadd.f32 %v99, %v532
  %v534 = vpop.f32.mrb[0].mxu0
  %v535 = vpop.f32.mrb[0].mxu0
  %v536 = vadd.f32 %v99, %v535
  %v537 = vpop.f32.mrb[0].mxu0
  %538 = vmatprep.mubr.bf16.mxu0 0
  %539 = vmatmul.mubr.bf16.gmra.mrb[0].mxu0 %v317
  %v540 = vpop.f32.mrb[0].mxu0
  %v541 = vadd.f32 %v99, %v540
  %v542 = vpop.f32.mrb[0].mxu0
  %v543 = vpop.f32.mrb[0].mxu0
  %v544 = vadd.f32 %v99, %v543
  %v545 = vpop.f32.mrb[0].mxu0
  %546 = vmatprep.mubr.bf16.mxu0 0
  %547 = vmatmul.mubr.bf16.gmra.mrb[0].mxu0 %v320
  %v548 = vpop.f32.mrb[0].mxu0
  %v549 = vadd.f32 %v99, %v548
  %v550 = vpop.f32.mrb[0].mxu0
  %v551 = vpop.f32.mrb[0].mxu0
  %v552 = vadd.f32 %v99, %v551
  %v553 = vpop.f32.mrb[0].mxu0
  %554 = vmatprep.mubr.bf16.mxu0 0
  %555 = vmatmul.mubr.bf16.gmra.mrb[0].mxu0 %v323
  %v556 = vpop.f32.mrb[0].mxu0
  %v557 = vadd.f32 %v99, %v556
  %v558 = vpop.f32.mrb[0].mxu0
  %v559 = vpop.f32.mrb[0].mxu0
  %v560 = vadd.f32 %v99, %v559
  %v561 = vpop.f32.mrb[0].mxu0
  %562 = vmatprep.mubr.bf16.mxu0 0
  %563 = vmatmul.mubr.bf16.gmra.mrb[0].mxu0 %v326
  %v564 = vpop.f32.mrb[0].mxu0
  %v565 = vadd.f32 %v99, %v564
  %v566 = vpop.f32.mrb[0].mxu0
  %v567 = vpop.f32.mrb[0].mxu0
  %v568 = vadd.f32 %v99, %v567
  %v569 = vpop.f32.mrb[0].mxu0
  %570 = vmatprep.mubr.bf16.mxu0 0
  %571 = vmatmul.mubr.bf16.gmra.mrb[0].mxu0 %v329
  %v572 = vpop.f32.mrb[0].mxu0
  %v573 = vadd.f32 %v99, %v572
  %v574 = vpop.f32.mrb[0].mxu0
  %v575 = vpop.f32.mrb[0].mxu0
  %v576 = vadd.f32 %v99, %v575
  %v577 = vpop.f32.mrb[0].mxu0
  %578 = vmatprep.mubr.bf16.mxu0 0
  %579 = vmatmul.mubr.bf16.gmra.mrb[0].mxu0 %v332
  %v580 = vpop.f32.mrb[0].mxu0
  %v581 = vadd.f32 %v99, %v580
  %v582 = vpop.f32.mrb[0].mxu0
  %v583 = vpop.f32.mrb[0].mxu0
  %v584 = vadd.f32 %v99, %v583
  %v585 = vpop.f32.mrb[0].mxu0
  %586 = vmatprep.mubr.bf16.mxu0 0
  %587 = vmatmul.mubr.bf16.gmra.mrb[0].mxu0 %v335
  %v588 = vpop.f32.mrb[0].mxu0
  %v589 = vadd.f32 %v99, %v588
  %v590 = vpop.f32.mrb[0].mxu0
  %v591 = vpop.f32.mrb[0].mxu0
  %v592 = vadd.f32 %v99, %v591
  %v593 = vpop.f32.mrb[0].mxu0
  %594 = vmatprep.mubr.bf16.mxu0 0
  %595 = vmatmul.mubr.bf16.gmra.mrb[0].mxu0 %v338
  %v596 = vpop.f32.mrb[0].mxu0
  %v597 = vadd.f32 %v99, %v596
  %v598 = vpop.f32.mrb[0].mxu0
  %v599 = vpop.f32.mrb[0].mxu0
  %v600 = vadd.f32 %v99, %v599
  %v601 = vpop.f32.mrb[0].mxu0
  %602 = vmatprep.mubr.bf16.mxu0 0
  %603 = vmatmul.mubr.bf16.gmra.mrb[0].mxu0 %v341
  %v604 = vpop.f32.mrb[0].mxu0
  %v605 = vadd.f32 %v99, %v604
  %v606 = vpop.f32.mrb[0].mxu0
  %v607 = vpop.f32.mrb[0].mxu0
  %v608 = vadd.f32 %v99, %v607
  %v609 = vpop.f32.mrb[0].mxu0
  %610 = vmatprep.mubr.bf16.mxu0 0
  %611 = vmatmul.mubr.bf16.gmra.mrb[0].mxu0 %v344
  %v612 = vpop.f32.mrb[0].mxu0
  %v613 = vadd.f32 %v99, %v612
  %v614 = vpop.f32.mrb[0].mxu0
  %v615 = vpop.f32.mrb[0].mxu0
  %v616 = vadd.f32 %v99, %v615
  %v617 = vpop.f32.mrb[0].mxu0
  %618 = vmatprep.mubr.bf16.mxu0 0
  %619 = vmatmul.mubr.bf16.gmra.mrb[0].mxu0 %v347
  %v620 = vpop.f32.mrb[0].mxu0
  %v621 = vadd.f32 %v99, %v620
  %v622 = vpop.f32.mrb[0].mxu0
  %v623 = vpop.f32.mrb[0].mxu0
  %v624 = vadd.f32 %v99, %v623
  %v625 = vpop.f32.mrb[0].mxu0
  %626 = vmatprep.mubr.bf16.mxu0 0
  %627 = vmatmul.mubr.bf16.gmra.mrb[0].mxu0 %v350
  %v628 = vpop.f32.mrb[0].mxu0
  %v629 = vadd.f32 %v99, %v628
  %v630 = vpop.f32.mrb[0].mxu0
  %v631 = vpop.f32.mrb[0].mxu0
  %v632 = vadd.f32 %v99, %v631
  %v633 = vpop.f32.mrb[0].mxu0
  %634 = vmatprep.mubr.bf16.mxu0 0
  %635 = vmatmul.mubr.bf16.gmra.mrb[0].mxu0 %v353
  %v636 = vpop.f32.mrb[0].mxu0
  %v637 = vadd.f32 %v99, %v636
  %v638 = vpop.f32.mrb[0].mxu0
  %v639 = vpop.f32.mrb[0].mxu0
  %v640 = vadd.f32 %v99, %v639
  %v641 = vpop.f32.mrb[0].mxu0
  %642 = vmatprep.mubr.bf16.mxu0 0
  %643 = vmatmul.mubr.bf16.gmra.mrb[0].mxu0 %v356
  %v644 = vpop.f32.mrb[0].mxu0
  %v645 = vadd.f32 %v99, %v644
  %v646 = vpop.f32.mrb[0].mxu0
  %v647 = vpop.f32.mrb[0].mxu0
  %v648 = vadd.f32 %v99, %v647
  %v649 = vpop.f32.mrb[0].mxu0
  %650 = vdwg.mxu0
  %v651 = vmax.f32 %v397, 0.0
  %v652 = vmax.f32 %v400, 0.0
  %v653 = vmax.f32 %v405, 0.0
  %v654 = vmax.f32 %v408, 0.0
  %v655 = vmax.f32 %v413, 0.0
  %v656 = vmax.f32 %v416, 0.0
  %v657 = vmax.f32 %v421, 0.0
  %v658 = vmax.f32 %v424, 0.0
  %v659 = vmax.f32 %v429, 0.0
  %v660 = vmax.f32 %v432, 0.0
  %v661 = vmax.f32 %v437, 0.0
  %v662 = vmax.f32 %v440, 0.0
  %v663 = vmax.f32 %v445, 0.0
  %v664 = vmax.f32 %v448, 0.0
  %v665 = vmax.f32 %v453, 0.0
  %v666 = vmax.f32 %v456, 0.0
  %v667 = vmax.f32 %v461, 0.0
  %v668 = vmax.f32 %v464, 0.0
  %v669 = vmax.f32 %v469, 0.0
  %v670 = vmax.f32 %v472, 0.0
  %v671 = vmax.f32 %v477, 0.0
  %v672 = vmax.f32 %v480, 0.0
  %v673 = vmax.f32 %v485, 0.0
  %v674 = vmax.f32 %v488, 0.0
  %v675 = vmax.f32 %v493, 0.0
  %v676 = vmax.f32 %v496, 0.0
  %v677 = vmax.f32 %v501, 0.0
  %v678 = vmax.f32 %v504, 0.0
  %v679 = vmax.f32 %v509, 0.0
  %v680 = vmax.f32 %v512, 0.0
  %v681 = vmax.f32 %v517, 0.0
  %v682 = vmax.f32 %v520, 0.0
  %v683 = vmax.f32 %v525, 0.0
  %v684 = vmax.f32 %v528, 0.0
  %v685 = vmax.f32 %v533, 0.0
  %v686 = vmax.f32 %v536, 0.0
  %v687 = vmax.f32 %v541, 0.0
  %v688 = vmax.f32 %v544, 0.0
  %v689 = vmax.f32 %v549, 0.0
  %v690 = vmax.f32 %v552, 0.0
  %v691 = vmax.f32 %v557, 0.0
  %v692 = vmax.f32 %v560, 0.0
  %v693 = vmax.f32 %v565, 0.0
  %v694 = vmax.f32 %v568, 0.0
  %v695 = vmax.f32 %v573, 0.0
  %v696 = vmax.f32 %v576, 0.0
  %v697 = vmax.f32 %v581, 0.0
  %v698 = vmax.f32 %v584, 0.0
  %v699 = vmax.f32 %v589, 0.0
  %v700 = vmax.f32 %v592, 0.0
  %v701 = vmax.f32 %v597, 0.0
  %v702 = vmax.f32 %v600, 0.0
  %v703 = vmax.f32 %v605, 0.0
  %v704 = vmax.f32 %v608, 0.0
  %v705 = vmax.f32 %v613, 0.0
  %v706 = vmax.f32 %v616, 0.0
  %v707 = vmax.f32 %v621, 0.0
  %v708 = vmax.f32 %v624, 0.0
  %v709 = vmax.f32 %v629, 0.0
  %v710 = vmax.f32 %v632, 0.0
  %v711 = vmax.f32 %v637, 0.0
  %v712 = vmax.f32 %v640, 0.0
  %v713 = vmax.f32 %v645, 0.0
  %v714 = vmax.f32 %v648, 0.0
  %v715 = vpack.c.bf16 %v652, %v651
  %v716 = vpack.c.bf16 %v654, %v653
  %v717 = vpack.c.bf16 %v656, %v655
  %v718 = vpack.c.bf16 %v658, %v657
  %v719 = vpack.c.bf16 %v660, %v659
  %v720 = vpack.c.bf16 %v662, %v661
  %v721 = vpack.c.bf16 %v664, %v663
  %v722 = vpack.c.bf16 %v666, %v665
  %v723 = vpack.c.bf16 %v668, %v667
  %v724 = vpack.c.bf16 %v670, %v669
  %v725 = vpack.c.bf16 %v672, %v671
  %v726 = vpack.c.bf16 %v674, %v673
  %v727 = vpack.c.bf16 %v676, %v675
  %v728 = vpack.c.bf16 %v678, %v677
  %v729 = vpack.c.bf16 %v680, %v679
  %v730 = vpack.c.bf16 %v682, %v681
  %v731 = vpack.c.bf16 %v684, %v683
  %v732 = vpack.c.bf16 %v686, %v685
  %v733 = vpack.c.bf16 %v688, %v687
  %v734 = vpack.c.bf16 %v690, %v689
  %v735 = vpack.c.bf16 %v692, %v691
  %v736 = vpack.c.bf16 %v694, %v693
  %v737 = vpack.c.bf16 %v696, %v695
  %v738 = vpack.c.bf16 %v698, %v697
  %v739 = vpack.c.bf16 %v700, %v699
  %v740 = vpack.c.bf16 %v702, %v701
  %v741 = vpack.c.bf16 %v704, %v703
  %v742 = vpack.c.bf16 %v706, %v705
  %v743 = vpack.c.bf16 %v708, %v707
  %v744 = vpack.c.bf16 %v710, %v709
  %v745 = vpack.c.bf16 %v712, %v711
  %v746 = vpack.c.bf16 %v714, %v713
  %v747 = vld [vmem:[%s3] sm:$0xf]
  %v748 = vld [vmem:[%s3 + $0x4] sm:$0xf]
  %v749 = vld [vmem:[%s3 + $0x8] sm:$0xf]
  %v750 = vld [vmem:[%s3 + $0xc] sm:$0xf]
  %v751 = vld [vmem:[%s3 + $0x10] sm:$0xf]
  %v752 = vld [vmem:[%s3 + $0x14] sm:$0xf]
  %v753 = vld [vmem:[%s3 + $0x18] sm:$0xf]
  %v754 = vld [vmem:[%s3 + $0x1c] sm:$0xf]
  %v755 = vld [vmem:[%s3 + $0x20] sm:$0xf]
  %v756 = vld [vmem:[%s3 + $0x24] sm:$0xf]
  %v757 = vld [vmem:[%s3 + $0x28] sm:$0xf]
  %v758 = vld [vmem:[%s3 + $0x2c] sm:$0xf]
  %v759 = vld [vmem:[%s3 + $0x30] sm:$0xf]
  %v760 = vld [vmem:[%s3 + $0x34] sm:$0xf]
  %v761 = vld [vmem:[%s3 + $0x38] sm:$0xf]
  %v762 = vld [vmem:[%s3 + $0x3c] sm:$0xf]
  %v763 = vld [vmem:[%s4] sm:$0x1]
  %v765 = vlaneseq
  %v766 = vshrl.u32 %v765, 7
  %v767 = vsub.s32 0, %v766
  %v768 = vrot.slane %v763, %v767
  %v786 = vunpack.c.l.b16 %v747
  %v787 = vunpack.c.l.b16 %v748
  %v788 = vunpack.c.l.b16 %v749
  %v789 = vunpack.c.l.b16 %v750
  %v790 = vunpack.c.l.b16 %v751
  %v791 = vunpack.c.l.b16 %v752
  %v792 = vunpack.c.l.b16 %v753
  %v793 = vunpack.c.l.b16 %v754
  %v794 = vunpack.c.l.b16 %v755
  %v795 = vunpack.c.l.b16 %v756
  %v796 = vunpack.c.l.b16 %v757
  %v797 = vunpack.c.l.b16 %v758
  %v798 = vunpack.c.l.b16 %v759
  %v799 = vunpack.c.l.b16 %v760
  %v800 = vunpack.c.l.b16 %v761
  %v801 = vunpack.c.l.b16 %v762
  %v802 = vpack.c.b16 %v787, %v786
  %v803 = vpack.c.b16 %v789, %v788
  %v804 = vpack.c.b16 %v791, %v790
  %v805 = vpack.c.b16 %v793, %v792
  %v806 = vpack.c.b16 %v795, %v794
  %v807 = vpack.c.b16 %v797, %v796
  %v808 = vpack.c.b16 %v799, %v798
  %v809 = vpack.c.b16 %v801, %v800
  %818 = vmatprep.subr.bf16.mxu0 0
  %819 = vmatpush1.bf16.msra.mxu0 %v802
  %820 = vmatprep.subr.bf16.mxu0 0
  %821 = vmatpush1.bf16.msra.mxu0 %v803
  %822 = vmatprep.subr.bf16.mxu0 0
  %823 = vmatpush1.bf16.msra.mxu0 %v804
  %824 = vmatprep.subr.bf16.mxu0 0
  %825 = vmatpush1.bf16.msra.mxu0 %v805
  %826 = vmatprep.subr.bf16.mxu0 0
  %827 = vmatpush1.bf16.msra.mxu0 %v806
  %828 = vmatprep.subr.bf16.mxu0 0
  %829 = vmatpush1.bf16.msra.mxu0 %v807
  %830 = vmatprep.subr.bf16.mxu0 0
  %831 = vmatpush1.bf16.msra.mxu0 %v808
  %832 = vmatprep.subr.bf16.mxu0 0
  %833 = vmatpush1.bf16.msra.mxu0 %v809
  %834 = vmatprep.subr.bf16.mxu0 0
  %835 = vmatpush1.bf16.msra.mxu0 0
  %836 = vmatprep.subr.bf16.mxu0 0
  %837 = vmatpush1.bf16.msra.mxu0 0
  %838 = vmatprep.subr.bf16.mxu0 0
  %839 = vmatpush1.bf16.msra.mxu0 0
  %840 = vmatprep.subr.bf16.mxu0 0
  %841 = vmatpush1.bf16.msra.mxu0 0
  %842 = vmatprep.subr.bf16.mxu0 0
  %843 = vmatpush1.bf16.msra.mxu0 0
  %844 = vmatprep.subr.bf16.mxu0 0
  %845 = vmatpush1.bf16.msra.mxu0 0
  %846 = vmatprep.subr.bf16.mxu0 0
  %847 = vmatpush1.bf16.msra.mxu0 0
  %848 = vmatprep.subr.bf16.mxu0 0
  %849 = vmatpush1.bf16.msra.mxu0 0
  %850 = vmatprep.mubr.bf16.mxu0 0
  %851 = vmatmul.mubr.bf16.gmra.mrb[0].mxu0 %v715
  %v852 = vpop.f32.mrb[0].mxu0
  %v853 = vadd.f32 %v768, %v852
  %v854 = vpop.f32.mrb[0].mxu0
  %v855 = vpop.f32.mrb[0].mxu0
  %v856 = vadd.f32 %v768, %v855
  %v857 = vpop.f32.mrb[0].mxu0
  %858 = vmatprep.mubr.bf16.mxu0 0
  %859 = vmatmul.mubr.bf16.gmra.mrb[0].mxu0 %v716
  %v860 = vpop.f32.mrb[0].mxu0
  %v861 = vadd.f32 %v768, %v860
  %v862 = vpop.f32.mrb[0].mxu0
  %v863 = vpop.f32.mrb[0].mxu0
  %v864 = vadd.f32 %v768, %v863
  %v865 = vpop.f32.mrb[0].mxu0
  %866 = vmatprep.mubr.bf16.mxu0 0
  %867 = vmatmul.mubr.bf16.gmra.mrb[0].mxu0 %v717
  %v868 = vpop.f32.mrb[0].mxu0
  %v869 = vadd.f32 %v768, %v868
  %v870 = vpop.f32.mrb[0].mxu0
  %v871 = vpop.f32.mrb[0].mxu0
  %v872 = vadd.f32 %v768, %v871
  %v873 = vpop.f32.mrb[0].mxu0
  %874 = vmatprep.mubr.bf16.mxu0 0
  %875 = vmatmul.mubr.bf16.gmra.mrb[0].mxu0 %v718
  %v876 = vpop.f32.mrb[0].mxu0
  %v877 = vadd.f32 %v768, %v876
  %v878 = vpop.f32.mrb[0].mxu0
  %v879 = vpop.f32.mrb[0].mxu0
  %v880 = vadd.f32 %v768, %v879
  %v881 = vpop.f32.mrb[0].mxu0
  %882 = vmatprep.mubr.bf16.mxu0 0
  %883 = vmatmul.mubr.bf16.gmra.mrb[0].mxu0 %v719
  %v884 = vpop.f32.mrb[0].mxu0
  %v885 = vadd.f32 %v768, %v884
  %v886 = vpop.f32.mrb[0].mxu0
  %v887 = vpop.f32.mrb[0].mxu0
  %v888 = vadd.f32 %v768, %v887
  %v889 = vpop.f32.mrb[0].mxu0
  %890 = vmatprep.mubr.bf16.mxu0 0
  %891 = vmatmul.mubr.bf16.gmra.mrb[0].mxu0 %v720
  %v892 = vpop.f32.mrb[0].mxu0
  %v893 = vadd.f32 %v768, %v892
  %v894 = vpop.f32.mrb[0].mxu0
  %v895 = vpop.f32.mrb[0].mxu0
  %v896 = vadd.f32 %v768, %v895
  %v897 = vpop.f32.mrb[0].mxu0
  %898 = vmatprep.mubr.bf16.mxu0 0
  %899 = vmatmul.mubr.bf16.gmra.mrb[0].mxu0 %v721
  %v900 = vpop.f32.mrb[0].mxu0
  %v901 = vadd.f32 %v768, %v900
  %v902 = vpop.f32.mrb[0].mxu0
  %v903 = vpop.f32.mrb[0].mxu0
  %v904 = vadd.f32 %v768, %v903
  %v905 = vpop.f32.mrb[0].mxu0
  %906 = vmatprep.mubr.bf16.mxu0 0
  %907 = vmatmul.mubr.bf16.gmra.mrb[0].mxu0 %v722
  %v908 = vpop.f32.mrb[0].mxu0
  %v909 = vadd.f32 %v768, %v908
  %v910 = vpop.f32.mrb[0].mxu0
  %v911 = vpop.f32.mrb[0].mxu0
  %v912 = vadd.f32 %v768, %v911
  %v913 = vpop.f32.mrb[0].mxu0
  %914 = vmatprep.mubr.bf16.mxu0 0
  %915 = vmatmul.mubr.bf16.gmra.mrb[0].mxu0 %v723
  %v916 = vpop.f32.mrb[0].mxu0
  %v917 = vadd.f32 %v768, %v916
  %v918 = vpop.f32.mrb[0].mxu0
  %v919 = vpop.f32.mrb[0].mxu0
  %v920 = vadd.f32 %v768, %v919
  %v921 = vpop.f32.mrb[0].mxu0
  %922 = vmatprep.mubr.bf16.mxu0 0
  %923 = vmatmul.mubr.bf16.gmra.mrb[0].mxu0 %v724
  %v924 = vpop.f32.mrb[0].mxu0
  %v925 = vadd.f32 %v768, %v924
  %v926 = vpop.f32.mrb[0].mxu0
  %v927 = vpop.f32.mrb[0].mxu0
  %v928 = vadd.f32 %v768, %v927
  %v929 = vpop.f32.mrb[0].mxu0
  %930 = vmatprep.mubr.bf16.mxu0 0
  %931 = vmatmul.mubr.bf16.gmra.mrb[0].mxu0 %v725
  %v932 = vpop.f32.mrb[0].mxu0
  %v933 = vadd.f32 %v768, %v932
  %v934 = vpop.f32.mrb[0].mxu0
  %v935 = vpop.f32.mrb[0].mxu0
  %v936 = vadd.f32 %v768, %v935
  %v937 = vpop.f32.mrb[0].mxu0
  %938 = vmatprep.mubr.bf16.mxu0 0
  %939 = vmatmul.mubr.bf16.gmra.mrb[0].mxu0 %v726
  %v940 = vpop.f32.mrb[0].mxu0
  %v941 = vadd.f32 %v768, %v940
  %v942 = vpop.f32.mrb[0].mxu0
  %v943 = vpop.f32.mrb[0].mxu0
  %v944 = vadd.f32 %v768, %v943
  %v945 = vpop.f32.mrb[0].mxu0
  %946 = vmatprep.mubr.bf16.mxu0 0
  %947 = vmatmul.mubr.bf16.gmra.mrb[0].mxu0 %v727
  %v948 = vpop.f32.mrb[0].mxu0
  %v949 = vadd.f32 %v768, %v948
  %v950 = vpop.f32.mrb[0].mxu0
  %v951 = vpop.f32.mrb[0].mxu0
  %v952 = vadd.f32 %v768, %v951
  %v953 = vpop.f32.mrb[0].mxu0
  %954 = vmatprep.mubr.bf16.mxu0 0
  %955 = vmatmul.mubr.bf16.gmra.mrb[0].mxu0 %v728
  %v956 = vpop.f32.mrb[0].mxu0
  %v957 = vadd.f32 %v768, %v956
  %v958 = vpop.f32.mrb[0].mxu0
  %v959 = vpop.f32.mrb[0].mxu0
  %v960 = vadd.f32 %v768, %v959
  %v961 = vpop.f32.mrb[0].mxu0
  %962 = vmatprep.mubr.bf16.mxu0 0
  %963 = vmatmul.mubr.bf16.gmra.mrb[0].mxu0 %v729
  %v964 = vpop.f32.mrb[0].mxu0
  %v965 = vadd.f32 %v768, %v964
  %v966 = vpop.f32.mrb[0].mxu0
  %v967 = vpop.f32.mrb[0].mxu0
  %v968 = vadd.f32 %v768, %v967
  %v969 = vpop.f32.mrb[0].mxu0
  %970 = vmatprep.mubr.bf16.mxu0 0
  %971 = vmatmul.mubr.bf16.gmra.mrb[0].mxu0 %v730
  %v972 = vpop.f32.mrb[0].mxu0
  %v973 = vadd.f32 %v768, %v972
  %v974 = vpop.f32.mrb[0].mxu0
  %v975 = vpop.f32.mrb[0].mxu0
  %v976 = vadd.f32 %v768, %v975
  %v977 = vpop.f32.mrb[0].mxu0
  %978 = vmatprep.mubr.bf16.mxu0 0
  %979 = vmatmul.mubr.bf16.gmra.mrb[0].mxu0 %v731
  %v980 = vpop.f32.mrb[0].mxu0
  %v981 = vadd.f32 %v768, %v980
  %v982 = vpop.f32.mrb[0].mxu0
  %v983 = vpop.f32.mrb[0].mxu0
  %v984 = vadd.f32 %v768, %v983
  %v985 = vpop.f32.mrb[0].mxu0
  %986 = vmatprep.mubr.bf16.mxu0 0
  %987 = vmatmul.mubr.bf16.gmra.mrb[0].mxu0 %v732
  %v988 = vpop.f32.mrb[0].mxu0
  %v989 = vadd.f32 %v768, %v988
  %v990 = vpop.f32.mrb[0].mxu0
  %v991 = vpop.f32.mrb[0].mxu0
  %v992 = vadd.f32 %v768, %v991
  %v993 = vpop.f32.mrb[0].mxu0
  %994 = vmatprep.mubr.bf16.mxu0 0
  %995 = vmatmul.mubr.bf16.gmra.mrb[0].mxu0 %v733
  %v996 = vpop.f32.mrb[0].mxu0
  %v997 = vadd.f32 %v768, %v996
  %v998 = vpop.f32.mrb[0].mxu0
  %v999 = vpop.f32.mrb[0].mxu0
  %v1000 = vadd.f32 %v768, %v999
  %v1001 = vpop.f32.mrb[0].mxu0
  %1002 = vmatprep.mubr.bf16.mxu0 0
  %1003 = vmatmul.mubr.bf16.gmra.mrb[0].mxu0 %v734
  %v1004 = vpop.f32.mrb[0].mxu0
  %v1005 = vadd.f32 %v768, %v1004
  %v1006 = vpop.f32.mrb[0].mxu0
  %v1007 = vpop.f32.mrb[0].mxu0
  %v1008 = vadd.f32 %v768, %v1007
  %v1009 = vpop.f32.mrb[0].mxu0
  %1010 = vmatprep.mubr.bf16.mxu0 0
  %1011 = vmatmul.mubr.bf16.gmra.mrb[0].mxu0 %v735
  %v1012 = vpop.f32.mrb[0].mxu0
  %v1013 = vadd.f32 %v768, %v1012
  %v1014 = vpop.f32.mrb[0].mxu0
  %v1015 = vpop.f32.mrb[0].mxu0
  %v1016 = vadd.f32 %v768, %v1015
  %v1017 = vpop.f32.mrb[0].mxu0
  %1018 = vmatprep.mubr.bf16.mxu0 0
  %1019 = vmatmul.mubr.bf16.gmra.mrb[0].mxu0 %v736
  %v1020 = vpop.f32.mrb[0].mxu0
  %v1021 = vadd.f32 %v768, %v1020
  %v1022 = vpop.f32.mrb[0].mxu0
  %v1023 = vpop.f32.mrb[0].mxu0
  %v1024 = vadd.f32 %v768, %v1023
  %v1025 = vpop.f32.mrb[0].mxu0
  %1026 = vmatprep.mubr.bf16.mxu0 0
  %1027 = vmatmul.mubr.bf16.gmra.mrb[0].mxu0 %v737
  %v1028 = vpop.f32.mrb[0].mxu0
  %v1029 = vadd.f32 %v768, %v1028
  %v1030 = vpop.f32.mrb[0].mxu0
  %v1031 = vpop.f32.mrb[0].mxu0
  %v1032 = vadd.f32 %v768, %v1031
  %v1033 = vpop.f32.mrb[0].mxu0
  %1034 = vmatprep.mubr.bf16.mxu0 0
  %1035 = vmatmul.mubr.bf16.gmra.mrb[0].mxu0 %v738
  %v1036 = vpop.f32.mrb[0].mxu0
  %v1037 = vadd.f32 %v768, %v1036
  %v1038 = vpop.f32.mrb[0].mxu0
  %v1039 = vpop.f32.mrb[0].mxu0
  %v1040 = vadd.f32 %v768, %v1039
  %v1041 = vpop.f32.mrb[0].mxu0
  %1042 = vmatprep.mubr.bf16.mxu0 0
  %1043 = vmatmul.mubr.bf16.gmra.mrb[0].mxu0 %v739
  %v1044 = vpop.f32.mrb[0].mxu0
  %v1045 = vadd.f32 %v768, %v1044
  %v1046 = vpop.f32.mrb[0].mxu0
  %v1047 = vpop.f32.mrb[0].mxu0
  %v1048 = vadd.f32 %v768, %v1047
  %v1049 = vpop.f32.mrb[0].mxu0
  %1050 = vmatprep.mubr.bf16.mxu0 0
  %1051 = vmatmul.mubr.bf16.gmra.mrb[0].mxu0 %v740
  %v1052 = vpop.f32.mrb[0].mxu0
  %v1053 = vadd.f32 %v768, %v1052
  %v1054 = vpop.f32.mrb[0].mxu0
  %v1055 = vpop.f32.mrb[0].mxu0
  %v1056 = vadd.f32 %v768, %v1055
  %v1057 = vpop.f32.mrb[0].mxu0
  %1058 = vmatprep.mubr.bf16.mxu0 0
  %1059 = vmatmul.mubr.bf16.gmra.mrb[0].mxu0 %v741
  %v1060 = vpop.f32.mrb[0].mxu0
  %v1061 = vadd.f32 %v768, %v1060
  %v1062 = vpop.f32.mrb[0].mxu0
  %v1063 = vpop.f32.mrb[0].mxu0
  %v1064 = vadd.f32 %v768, %v1063
  %v1065 = vpop.f32.mrb[0].mxu0
  %1066 = vmatprep.mubr.bf16.mxu0 0
  %1067 = vmatmul.mubr.bf16.gmra.mrb[0].mxu0 %v742
  %v1068 = vpop.f32.mrb[0].mxu0
  %v1069 = vadd.f32 %v768, %v1068
  %v1070 = vpop.f32.mrb[0].mxu0
  %v1071 = vpop.f32.mrb[0].mxu0
  %v1072 = vadd.f32 %v768, %v1071
  %v1073 = vpop.f32.mrb[0].mxu0
  %1074 = vmatprep.mubr.bf16.mxu0 0
  %1075 = vmatmul.mubr.bf16.gmra.mrb[0].mxu0 %v743
  %v1076 = vpop.f32.mrb[0].mxu0
  %v1077 = vadd.f32 %v768, %v1076
  %v1078 = vpop.f32.mrb[0].mxu0
  %v1079 = vpop.f32.mrb[0].mxu0
  %v1080 = vadd.f32 %v768, %v1079
  %v1081 = vpop.f32.mrb[0].mxu0
  %1082 = vmatprep.mubr.bf16.mxu0 0
  %1083 = vmatmul.mubr.bf16.gmra.mrb[0].mxu0 %v744
  %v1084 = vpop.f32.mrb[0].mxu0
  %v1085 = vadd.f32 %v768, %v1084
  %v1086 = vpop.f32.mrb[0].mxu0
  %v1087 = vpop.f32.mrb[0].mxu0
  %v1088 = vadd.f32 %v768, %v1087
  %v1089 = vpop.f32.mrb[0].mxu0
  %1090 = vmatprep.mubr.bf16.mxu0 0
  %1091 = vmatmul.mubr.bf16.gmra.mrb[0].mxu0 %v745
  %v1092 = vpop.f32.mrb[0].mxu0
  %v1093 = vadd.f32 %v768, %v1092
  %v1094 = vpop.f32.mrb[0].mxu0
  %v1095 = vpop.f32.mrb[0].mxu0
  %v1096 = vadd.f32 %v768, %v1095
  %v1097 = vpop.f32.mrb[0].mxu0
  %1098 = vmatprep.mubr.bf16.mxu0 0
  %1099 = vmatmul.mubr.bf16.gmra.mrb[0].mxu0 %v746
  %v1100 = vpop.f32.mrb[0].mxu0
  %v1101 = vadd.f32 %v768, %v1100
  %v1102 = vpop.f32.mrb[0].mxu0
  %v1103 = vpop.f32.mrb[0].mxu0
  %v1104 = vadd.f32 %v768, %v1103
  %v1105 = vpop.f32.mrb[0].mxu0
  %1106 = vdwg.mxu0
  %v1107 = vmax.f32 %v853, 0.0
  %v1108 = vmax.f32 %v856, 0.0
  %v1109 = vmax.f32 %v861, 0.0
  %v1110 = vmax.f32 %v864, 0.0
  %v1111 = vmax.f32 %v869, 0.0
  %v1112 = vmax.f32 %v872, 0.0
  %v1113 = vmax.f32 %v877, 0.0
  %v1114 = vmax.f32 %v880, 0.0
  %v1115 = vmax.f32 %v885, 0.0
  %v1116 = vmax.f32 %v888, 0.0
  %v1117 = vmax.f32 %v893, 0.0
  %v1118 = vmax.f32 %v896, 0.0
  %v1119 = vmax.f32 %v901, 0.0
  %v1120 = vmax.f32 %v904, 0.0
  %v1121 = vmax.f32 %v909, 0.0
  %v1122 = vmax.f32 %v912, 0.0
  %v1123 = vmax.f32 %v917, 0.0
  %v1124 = vmax.f32 %v920, 0.0
  %v1125 = vmax.f32 %v925, 0.0
  %v1126 = vmax.f32 %v928, 0.0
  %v1127 = vmax.f32 %v933, 0.0
  %v1128 = vmax.f32 %v936, 0.0
  %v1129 = vmax.f32 %v941, 0.0
  %v1130 = vmax.f32 %v944, 0.0
  %v1131 = vmax.f32 %v949, 0.0
  %v1132 = vmax.f32 %v952, 0.0
  %v1133 = vmax.f32 %v957, 0.0
  %v1134 = vmax.f32 %v960, 0.0
  %v1135 = vmax.f32 %v965, 0.0
  %v1136 = vmax.f32 %v968, 0.0
  %v1137 = vmax.f32 %v973, 0.0
  %v1138 = vmax.f32 %v976, 0.0
  %v1139 = vmax.f32 %v981, 0.0
  %v1140 = vmax.f32 %v984, 0.0
  %v1141 = vmax.f32 %v989, 0.0
  %v1142 = vmax.f32 %v992, 0.0
  %v1143 = vmax.f32 %v997, 0.0
  %v1144 = vmax.f32 %v1000, 0.0
  %v1145 = vmax.f32 %v1005, 0.0
  %v1146 = vmax.f32 %v1008, 0.0
  %v1147 = vmax.f32 %v1013, 0.0
  %v1148 = vmax.f32 %v1016, 0.0
  %v1149 = vmax.f32 %v1021, 0.0
  %v1150 = vmax.f32 %v1024, 0.0
  %v1151 = vmax.f32 %v1029, 0.0
  %v1152 = vmax.f32 %v1032, 0.0
  %v1153 = vmax.f32 %v1037, 0.0
  %v1154 = vmax.f32 %v1040, 0.0
  %v1155 = vmax.f32 %v1045, 0.0
  %v1156 = vmax.f32 %v1048, 0.0
  %v1157 = vmax.f32 %v1053, 0.0
  %v1158 = vmax.f32 %v1056, 0.0
  %v1159 = vmax.f32 %v1061, 0.0
  %v1160 = vmax.f32 %v1064, 0.0
  %v1161 = vmax.f32 %v1069, 0.0
  %v1162 = vmax.f32 %v1072, 0.0
  %v1163 = vmax.f32 %v1077, 0.0
  %v1164 = vmax.f32 %v1080, 0.0
  %v1165 = vmax.f32 %v1085, 0.0
  %v1166 = vmax.f32 %v1088, 0.0
  %v1167 = vmax.f32 %v1093, 0.0
  %v1168 = vmax.f32 %v1096, 0.0
  %v1169 = vmax.f32 %v1101, 0.0
  %v1170 = vmax.f32 %v1104, 0.0
  %v1171 = vld [vmem:[%s5] sm:$0xf]
  %v1172 = vpack.c.bf16 %v1108, %v1107
  %v1173 = vpack.c.bf16 %v1110, %v1109
  %v1174 = vpack.c.bf16 %v1112, %v1111
  %v1175 = vpack.c.bf16 %v1114, %v1113
  %v1176 = vpack.c.bf16 %v1116, %v1115
  %v1177 = vpack.c.bf16 %v1118, %v1117
  %v1178 = vpack.c.bf16 %v1120, %v1119
  %v1179 = vpack.c.bf16 %v1122, %v1121
  %v1180 = vpack.c.bf16 %v1124, %v1123
  %v1181 = vpack.c.bf16 %v1126, %v1125
  %v1182 = vpack.c.bf16 %v1128, %v1127
  %v1183 = vpack.c.bf16 %v1130, %v1129
  %v1184 = vpack.c.bf16 %v1132, %v1131
  %v1185 = vpack.c.bf16 %v1134, %v1133
  %v1186 = vpack.c.bf16 %v1136, %v1135
  %v1187 = vpack.c.bf16 %v1138, %v1137
  %v1188 = vpack.c.bf16 %v1140, %v1139
  %v1189 = vpack.c.bf16 %v1142, %v1141
  %v1190 = vpack.c.bf16 %v1144, %v1143
  %v1191 = vpack.c.bf16 %v1146, %v1145
  %v1192 = vpack.c.bf16 %v1148, %v1147
  %v1193 = vpack.c.bf16 %v1150, %v1149
  %v1194 = vpack.c.bf16 %v1152, %v1151
  %v1195 = vpack.c.bf16 %v1154, %v1153
  %v1196 = vpack.c.bf16 %v1156, %v1155
  %v1197 = vpack.c.bf16 %v1158, %v1157
  %v1198 = vpack.c.bf16 %v1160, %v1159
  %v1199 = vpack.c.bf16 %v1162, %v1161
  %v1200 = vpack.c.bf16 %v1164, %v1163
  %v1201 = vpack.c.bf16 %v1166, %v1165
  %v1202 = vpack.c.bf16 %v1168, %v1167
  %v1203 = vpack.c.bf16 %v1170, %v1169
  %v1204 = vld [vmem:[#allocation2] sm:$0x1]
  %v1206 = vlaneseq
  %v1207 = vshrl.u32 %v1206, 7
  %v1208 = vsub.s32 0, %v1207
  %v1209 = vrot.slane %v1204, %v1208
  %1210 = vset.pattern.permute.xlu0 0
  %1211 = vperm.xlu0 %1210, %v1209
  %v1212 = vpop.permute.xlu0 %1211
  %1214 = vmatprep.subr.bf16.mxu0 0
  %1215 = vmatpush1.bf16.xpose.msra.mxu0 %v1172
  %1216 = vmatprep.subr.bf16.mxu0 0
  %1217 = vmatpush1.bf16.xpose.msra.mxu0 %v1173
  %1218 = vmatprep.subr.bf16.mxu0 0
  %1219 = vmatpush1.bf16.xpose.msra.mxu0 %v1174
  %1220 = vmatprep.subr.bf16.mxu0 0
  %1221 = vmatpush1.bf16.xpose.msra.mxu0 %v1175
  %1222 = vmatprep.subr.bf16.mxu0 0
  %1223 = vmatpush1.bf16.xpose.msra.mxu0 %v1176
  %1224 = vmatprep.subr.bf16.mxu0 0
  %1225 = vmatpush1.bf16.xpose.msra.mxu0 %v1177
  %1226 = vmatprep.subr.bf16.mxu0 0
  %1227 = vmatpush1.bf16.xpose.msra.mxu0 %v1178
  %1228 = vmatprep.subr.bf16.mxu0 0
  %1229 = vmatpush1.bf16.xpose.msra.mxu0 %v1179
  %1230 = vmatprep.subr.bf16.mxu0 0
  %1231 = vmatpush1.bf16.xpose.msra.mxu0 %v1180
  %1232 = vmatprep.subr.bf16.mxu0 0
  %1233 = vmatpush1.bf16.xpose.msra.mxu0 %v1181
  %1234 = vmatprep.subr.bf16.mxu0 0
  %1235 = vmatpush1.bf16.xpose.msra.mxu0 %v1182
  %1236 = vmatprep.subr.bf16.mxu0 0
  %1237 = vmatpush1.bf16.xpose.msra.mxu0 %v1183
  %1238 = vmatprep.subr.bf16.mxu0 0
  %1239 = vmatpush1.bf16.xpose.msra.mxu0 %v1184
  %1240 = vmatprep.subr.bf16.mxu0 0
  %1241 = vmatpush1.bf16.xpose.msra.mxu0 %v1185
  %1242 = vmatprep.subr.bf16.mxu0 0
  %1243 = vmatpush1.bf16.xpose.msra.mxu0 %v1186
  %1244 = vmatprep.subr.bf16.mxu0 0
  %1245 = vmatpush1.bf16.xpose.msra.mxu0 %v1187
  %1246 = vmatprep.mubr.bf16.mxu0 0
  %1247 = vmatmul.mubr.bf16.gmra.mrb[0].mxu0 %v1171
  %v1248 = vpop.f32.mrb[0].mxu0
  %v1249 = vadd.f32 %v1212, %v1248
  %v1250 = vpop.f32.mrb[0].mxu0
  %v1251 = vadd.f32 %v1212, %v1250
  %v1252 = vpop.f32.mrb[0].mxu0
  %v1253 = vpop.f32.mrb[0].mxu0
  %1254 = vdwg.mxu0
  %1255 = vmatprep.subr.bf16.mxu0 0
  %1256 = vmatpush1.bf16.xpose.msra.mxu0 %v1188
  %1257 = vmatprep.subr.bf16.mxu0 0
  %1258 = vmatpush1.bf16.xpose.msra.mxu0 %v1189
  %1259 = vmatprep.subr.bf16.mxu0 0
  %1260 = vmatpush1.bf16.xpose.msra.mxu0 %v1190
  %1261 = vmatprep.subr.bf16.mxu0 0
  %1262 = vmatpush1.bf16.xpose.msra.mxu0 %v1191
  %1263 = vmatprep.subr.bf16.mxu0 0
  %1264 = vmatpush1.bf16.xpose.msra.mxu0 %v1192
  %1265 = vmatprep.subr.bf16.mxu0 0
  %1266 = vmatpush1.bf16.xpose.msra.mxu0 %v1193
  %1267 = vmatprep.subr.bf16.mxu0 0
  %1268 = vmatpush1.bf16.xpose.msra.mxu0 %v1194
  %1269 = vmatprep.subr.bf16.mxu0 0
  %1270 = vmatpush1.bf16.xpose.msra.mxu0 %v1195
  %1271 = vmatprep.subr.bf16.mxu0 0
  %1272 = vmatpush1.bf16.xpose.msra.mxu0 %v1196
  %1273 = vmatprep.subr.bf16.mxu0 0
  %1274 = vmatpush1.bf16.xpose.msra.mxu0 %v1197
  %1275 = vmatprep.subr.bf16.mxu0 0
  %1276 = vmatpush1.bf16.xpose.msra.mxu0 %v1198
  %1277 = vmatprep.subr.bf16.mxu0 0
  %1278 = vmatpush1.bf16.xpose.msra.mxu0 %v1199
  %1279 = vmatprep.subr.bf16.mxu0 0
  %1280 = vmatpush1.bf16.xpose.msra.mxu0 %v1200
  %1281 = vmatprep.subr.bf16.mxu0 0
  %1282 = vmatpush1.bf16.xpose.msra.mxu0 %v1201
  %1283 = vmatprep.subr.bf16.mxu0 0
  %1284 = vmatpush1.bf16.xpose.msra.mxu0 %v1202
  %1285 = vmatprep.subr.bf16.mxu0 0
  %1286 = vmatpush1.bf16.xpose.msra.mxu0 %v1203
  %1287 = vmatprep.mubr.bf16.mxu0 0
  %1288 = vmatmul.mubr.bf16.gmra.mrb[0].mxu0 %v1171
  %v1289 = vpop.f32.mrb[0].mxu0
  %v1290 = vadd.f32 %v1212, %v1289
  %v1291 = vpop.f32.mrb[0].mxu0
  %v1292 = vadd.f32 %v1212, %v1291
  %v1293 = vpop.f32.mrb[0].mxu0
  %v1294 = vpop.f32.mrb[0].mxu0
  %1295 = vdwg.mxu0
  %1296 = vst [vmem:[%s7] sm:$0xff] %v1249
  %1297 = vst [vmem:[%s7 + $0x8] sm:$0xff] %v1251
  %1298 = vst [vmem:[%s7 + $0x10] sm:$0xff] %v1290
  %1299 = vst [vmem:[%s7 + $0x18] sm:$0xff] %v1292
  // Predicated region
  $region30: #{critic_forward.1} parent=0 // pred_check
    _
  $region31: #{critic_forward.1} parent=0 // pred_check_branch
    %1301 = sbr.rel (0) target = $region33
  $region32: #{critic_forward.1} parent=0 // pred_region
    _
  $region33: #{critic_forward.1} parent=0 // pred_fallthru
    _
  // Predicated region
  $region34: #{critic_forward.1} parent=0 // pred_check
    _
  $region35: #{critic_forward.1} parent=0 // pred_check_branch
    %1303 = sbr.rel (0) target = $region37
  $region36: #{critic_forward.1} parent=0 // pred_region
    _
  $region37: #{critic_forward.1} parent=0 // pred_fallthru
    _

</llo_original>
